<compile_context>
chip_gen: v7x
topology: tpu7x:2x2x1
jax: 0.10.0
libtpu: 0.0.40
codegen_flags: <defaults>
</compile_context>

<pallas_src>
import functools

import jax
import jax.numpy as jnp
import numpy as np
from jax.experimental import pallas as pl
from jax.experimental.pallas import tpu as pltpu


def _temporal_block_kernel(x_ref, w1_ref, b1_ref, w2_ref, b2_ref, *rest,
                           LT, pad, K, dil, cin, cout, use_ds):
    # x_ref  : (cin, LT)        bf16  current time tile, channels-first
    # w1_ref : (K, cout, cin)   bf16  per-tap conv1 weights
    # w2_ref : (K, cout, cout)  bf16  per-tap conv2 weights
    # wd_ref : (cout, cin)      bf16  1x1 downsample (only if use_ds)
    # b*_ref : (cout, 1)        f32
    # o_ref  : (cout, LT)       bf16
    # xw_ref : (cin,  pad+LT)   bf16  scratch -- causally padded x (halo carried)
    # hw_ref : (cout, pad+LT)   bf16  scratch -- causally padded h1 (halo carried)
    if use_ds:
        wd_ref, bd_ref, o_ref, xw_ref, hw_ref = rest
    else:
        o_ref, xw_ref, hw_ref = rest

    l = pl.program_id(1)

    # --- causal halo handling (left padding, carried across time tiles) -----
    if pad > 0:
        @pl.when(l == 0)
        def _():  # first tile of this batch element: zero left padding
            xw_ref[:, pl.ds(0, pad)] = jnp.zeros((cin, pad), xw_ref.dtype)
            hw_ref[:, pl.ds(0, pad)] = jnp.zeros((cout, pad), hw_ref.dtype)

        @pl.when(l > 0)
        def _():  # carry the last `pad` columns of the previous tile
            xw_ref[:, pl.ds(0, pad)] = xw_ref[:, pl.ds(LT, pad)]
            hw_ref[:, pl.ds(0, pad)] = hw_ref[:, pl.ds(LT, pad)]

    # --- stage the current x tile (bf16, single store) ----------------------
    x_tile = x_ref[...]                                    # (cin, LT) bf16
    xw_ref[:, pl.ds(pad, LT)] = x_tile

    # --- conv1: K accumulating MXU matmuls straight off the halo buffer -----
    acc = jnp.dot(w1_ref[0], xw_ref[:, pl.ds(0, LT)],
                  preferred_element_type=jnp.float32)      # (cout, LT) f32
    for j in range(1, K):                                  # static unroll
        acc = acc + jnp.dot(w1_ref[j], xw_ref[:, pl.ds(j * dil, LT)],
                            preferred_element_type=jnp.float32)
    h1 = jnp.maximum(acc + b1_ref[...], 0.0)               # bias + ReLU (f32)
    hw_ref[:, pl.ds(pad, LT)] = h1.astype(hw_ref.dtype)

    # --- conv2: same accumulating-tap scheme ---------------------------------
    acc = jnp.dot(w2_ref[0], hw_ref[:, pl.ds(0, LT)],
                  preferred_element_type=jnp.float32)
    for j in range(1, K):
        acc = acc + jnp.dot(w2_ref[j], hw_ref[:, pl.ds(j * dil, LT)],
                            preferred_element_type=jnp.float32)
    h2 = jnp.maximum(acc + b2_ref[...], 0.0)

    # --- residual branch + final ReLU ----------------------------------------
    if use_ds:
        res = jnp.dot(wd_ref[...], x_tile,
                      preferred_element_type=jnp.float32) + bd_ref[...]
    else:
        res = x_tile.astype(jnp.float32)                   # identity residual

    o_ref[...] = jnp.maximum(h2 + res, 0.0).astype(o_ref.dtype)


def _round_up(a, m):
    return -(-a // m) * m


def _vmem_budget_bytes():
    """~75% of per-core physical VMEM (headroom for Mosaic internal scratch)."""
    try:
        cap = int(pltpu.get_tpu_info().vmem_capacity_bytes)
    except Exception:
        cap = 64 * 1024 * 1024      # conservative fallback (v7x-sized VMEM)
    return (cap * 3) // 4


def _pick_l_tile(L, pad, cin, cout, K, budget_bytes):
    """Largest 128-multiple time tile that fits the VMEM byte budget."""
    # Fixed residents: double-buffered bf16 weights, f32 biases, halo columns,
    # plus slack for Mosaic internals.
    fixed = 2 * 2 * (K * cout * cin + K * cout * cout + cout * cin)
    fixed += 2 * 4 * 3 * cout
    fixed += 2 * (cin + cout) * pad
    fixed += 4 * 1024 * 1024
    # Per-time-column bytes: bf16 in/out pipeline buffers (double-buffered),
    # bf16 halo scratch bodies, and f32 compute temporaries (acc/h/res).
    per_col = 2 * 2 * (cin + cout) + 2 * (cin + cout) + 4 * (4 * cout + cin)
    avail = max(budget_bytes - fixed, per_col * 128)
    lt = (avail // per_col) // 128 * 128
    lt = max(128, min(lt, 8192))                 # diminishing returns past ~8k lanes
    if pad > 0:
        lt = max(lt, _round_up(pad, 128))        # halo carry requires LT >= pad
    lt = min(lt, _round_up(L, 128))              # don't pad wildly past the sequence
    return lt


def temporal_block(x, w1, b1, w2, b2, wd=None, bd=None, *,
                   kernel_size, dilation, _force_lt=None):
    """x: (N, Cin, L) -> (N, Cout, L) in x.dtype.  NCL layout in and out.

    Internally bf16 activations / bf16 MXU operands with f32 accumulation, so
    expect ~1e-2-level differences versus a pure-f32 reference.
    """
    N, Cin, L = x.shape
    Cout = w1.shape[0]
    K, dil = kernel_size, dilation
    pad = (K - 1) * dil
    use_ds = (Cin != Cout)                       # PyTorch skips downsample otherwise
    if use_ds and (wd is None or bd is None):
        raise ValueError("downsample weights required when n_inputs != n_outputs")

    budget = _vmem_budget_bytes()
    LT = _force_lt if _force_lt is not None else _pick_l_tile(L, pad, Cin, Cout, K, budget)
    n_lt = _round_up(L, LT) // LT
    L_pad = n_lt * LT
    if n_lt > 1:
        assert LT >= pad, "halo carry requires the L tile to cover the causal padding"
    # TODO(synk): if both pad and the channel footprint exceed the VMEM budget
    # (huge dilation on a huge-channel config) this still compiles to a single
    # oversized tile; that configuration needs a streamed-halo variant.

    # bf16 activations at the HBM boundary; right-pad L (causal conv -> the
    # zero tail cannot influence columns < L) and cast once in the wrapper.
    x_in = x.astype(jnp.bfloat16)
    if L_pad != L:
        x_in = jnp.pad(x_in, ((0, 0), (0, 0), (0, L_pad - L)))

    # Per-tap weights (K, Cout, C) bf16; biases as f32 (Cout, 1) columns.
    w1t = jnp.transpose(w1, (2, 0, 1)).astype(jnp.bfloat16)       # (K, Cout, Cin)
    w2t = jnp.transpose(w2, (2, 0, 1)).astype(jnp.bfloat16)       # (K, Cout, Cout)
    b1c = b1.reshape(Cout, 1).astype(jnp.float32)
    b2c = b2.reshape(Cout, 1).astype(jnp.float32)

    in_specs = [
        pl.BlockSpec((None, Cin, LT), lambda n, l: (n, 0, l)),     # x tile
        pl.BlockSpec((K, Cout, Cin), lambda n, l: (0, 0, 0)),      # w1 taps
        pl.BlockSpec((Cout, 1), lambda n, l: (0, 0)),              # b1
        pl.BlockSpec((K, Cout, Cout), lambda n, l: (0, 0, 0)),     # w2 taps
        pl.BlockSpec((Cout, 1), lambda n, l: (0, 0)),              # b2
    ]
    args = [x_in, w1t, b1c, w2t, b2c]
    if use_ds:
        wds = wd[:, :, 0].astype(jnp.bfloat16)                     # (Cout, Cin)
        bdc = bd.reshape(Cout, 1).astype(jnp.float32)
        in_specs += [
            pl.BlockSpec((Cout, Cin), lambda n, l: (0, 0)),        # wd
            pl.BlockSpec((Cout, 1), lambda n, l: (0, 0)),          # bd
        ]
        args += [wds, bdc]

    kernel = functools.partial(_temporal_block_kernel,
                               LT=LT, pad=pad, K=K, dil=dil,
                               cin=Cin, cout=Cout, use_ds=use_ds)

    out = pl.pallas_call(
        kernel,
        out_shape=jax.ShapeDtypeStruct((N, Cout, L_pad), jnp.bfloat16),
        grid_spec=pltpu.PrefetchScalarGridSpec(
            num_scalar_prefetch=0,
            grid=(N, n_lt),
            in_specs=in_specs,
            out_specs=pl.BlockSpec((None, Cout, LT), lambda n, l: (n, 0, l)),
            scratch_shapes=[
                pltpu.VMEM((Cin, pad + LT), jnp.bfloat16),    # causal-padded x
                pltpu.VMEM((Cout, pad + LT), jnp.bfloat16),   # causal-padded h1
            ],
        ),
        # Batch axis "parallel" (megacore); time axis "arbitrary" (carried halo).
        compiler_params=pltpu.CompilerParams(
            dimension_semantics=("parallel", "arbitrary"),
            vmem_limit_bytes=budget,
        ),
    )(*args)

    if L_pad != L:
        out = out[:, :, :L]
    return out.astype(x.dtype)


def _reference(x, w1, b1, w2, b2, wd=None, bd=None, *, kernel_size, dilation):
    """Pure-JAX f32 reference matching the PyTorch forward (dropout = identity)."""
    N, Cin, L = x.shape
    k, dil = kernel_size, dilation
    pad = (k - 1) * dil

    def causal_conv(inp, W, b):
        xp = jnp.pad(inp, ((0, 0), (0, 0), (pad, 0)))
        out = jnp.zeros((N, W.shape[0], L), jnp.float32)
        for j in range(k):
            out = out + jnp.einsum('ncl,oc->nol',
                                   xp[:, :, j * dil:j * dil + L], W[:, :, j])
        return out + b[None, :, None]

    h1 = jax.nn.relu(causal_conv(x, w1, b1))
    h2 = jax.nn.relu(causal_conv(h1, w2, b2))
    if wd is None:
        res = x
    else:
        res = jnp.einsum('ncl,oc->nol', x, wd[:, :, 0]) + bd[None, :, None]
    return jax.nn.relu(h2 + res)


if __name__ == "__main__":
    key = jax.random.PRNGKey(0)
    ks = jax.random.split(key, 10)

    # TemporalBlock(n_inputs=4, n_outputs=8, kernel_size=3, stride=1,
    #               dilation=2, padding=(3-1)*2=4)  -> downsample residual path
    N, Cin, Cout, L = 2, 4, 8, 16
    K, DIL = 3, 2
    x = jax.random.normal(ks[0], (N, Cin, L), jnp.float32)
    w1 = jax.random.normal(ks[1], (Cout, Cin, K), jnp.float32) * 0.2
    b1 = jax.random.normal(ks[2], (Cout,), jnp.float32) * 0.1
    w2 = jax.random.normal(ks[3], (Cout, Cout, K), jnp.float32) * 0.2
    b2 = jax.random.normal(ks[4], (Cout,), jnp.float32) * 0.1
    wd = jax.random.normal(ks[5], (Cout, Cin, 1), jnp.float32) * 0.2   # 1x1 downsample
    bd = jax.random.normal(ks[6], (Cout,), jnp.float32) * 0.1

    out = jax.block_until_ready(
        temporal_block(x, w1, b1, w2, b2, wd, bd, kernel_size=K, dilation=DIL))
    ref = _reference(x, w1, b1, w2, b2, wd, bd, kernel_size=K, dilation=DIL)
    # bf16 activations / MXU operands with f32 accumulation -> loose tolerance
    np.testing.assert_allclose(np.asarray(out), np.asarray(ref), rtol=5e-2, atol=5e-2)

    # n_inputs == n_outputs -> identity residual (downsample skipped, as in PyTorch)
    C2 = 8
    x2 = jax.random.normal(ks[7], (N, C2, L), jnp.float32)
    w1b = jax.random.normal(ks[1], (C2, C2, K), jnp.float32) * 0.2
    w2b = jax.random.normal(ks[3], (C2, C2, K), jnp.float32) * 0.2
    out2 = jax.block_until_ready(
        temporal_block(x2, w1b, b1, w2b, b2, kernel_size=K, dilation=DIL))
    ref2 = _reference(x2, w1b, b1, w2b, b2, kernel_size=K, dilation=DIL)
    np.testing.assert_allclose(np.asarray(out2), np.asarray(ref2), rtol=5e-2, atol=5e-2)

    # Longer sequence with a forced small time tile: exercises the carried
    # causal halo across tiles and the right-pad / tail-slice path.
    L3 = 300
    x3 = jax.random.normal(ks[8], (N, Cin, L3), jnp.float32)
    out3 = jax.block_until_ready(
        temporal_block(x3, w1, b1, w2, b2, wd, bd, kernel_size=K, dilation=DIL,
                       _force_lt=128))
    ref3 = _reference(x3, w1, b1, w2, b2, wd, bd, kernel_size=K, dilation=DIL)
    np.testing.assert_allclose(np.asarray(out3), np.asarray(ref3), rtol=5e-2, atol=5e-2)

    print("KERNEL_OK")
</pallas_src>

<mosaic_0001>
module attributes {stable_mosaic.version = 11 : i64} {
  func.func @_temporal_block_kernel(%arg0: i32, %arg1: i32, %arg2: memref<1x4x128xbf16, #tpu.memory_space<vmem>>, %arg3: memref<3x8x4xbf16, #tpu.memory_space<vmem>>, %arg4: memref<8x1xf32, #tpu.memory_space<vmem>>, %arg5: memref<3x8x8xbf16, #tpu.memory_space<vmem>>, %arg6: memref<8x1xf32, #tpu.memory_space<vmem>>, %arg7: memref<8x4xbf16, #tpu.memory_space<vmem>>, %arg8: memref<8x1xf32, #tpu.memory_space<vmem>>, %arg9: memref<1x8x128xbf16, #tpu.memory_space<vmem>>, %arg10: memref<4x132xbf16, #tpu.memory_space<vmem>>, %arg11: memref<8x132xbf16, #tpu.memory_space<vmem>>) attributes {dimension_semantics = [#tpu.dimension_semantics<parallel>, #tpu.dimension_semantics<arbitrary>], iteration_bounds = array<i64: 2, 1>, scalar_prefetch = 0 : i64, scratch_operands = 2 : i64, tpu.core_type = #tpu.core_type<tc>, window_params = [{transform_indices = @transform_0, window_bounds = array<i64: 1, 4, 128>}, {pipeline_mode = #tpu.pipeline_mode<synchronous>, transform_indices = @transform_1, window_bounds = array<i64: 3, 8, 4>}, {pipeline_mode = #tpu.pipeline_mode<synchronous>, transform_indices = @transform_2, window_bounds = array<i64: 8, 1>}, {pipeline_mode = #tpu.pipeline_mode<synchronous>, transform_indices = @transform_3, window_bounds = array<i64: 3, 8, 8>}, {pipeline_mode = #tpu.pipeline_mode<synchronous>, transform_indices = @transform_4, window_bounds = array<i64: 8, 1>}, {pipeline_mode = #tpu.pipeline_mode<synchronous>, transform_indices = @transform_5, window_bounds = array<i64: 8, 4>}, {pipeline_mode = #tpu.pipeline_mode<synchronous>, transform_indices = @transform_6, window_bounds = array<i64: 8, 1>}, {transform_indices = @transform_7, window_bounds = array<i64: 1, 8, 128>}]} {
    %c0_i32 = arith.constant 0 : i32
    %0 = arith.cmpi eq, %arg1, %c0_i32 : i32
    %1 = arith.extui %0 : i1 to i32
    %c0_i32_0 = arith.constant 0 : i32
    %2 = arith.cmpi ne, %1, %c0_i32_0 : i32
    scf.if %2 {
      %cst_56 = arith.constant 0.000000e+00 : bf16
      %61 = vector.broadcast %cst_56 : bf16 to vector<4x4xbf16>
      %c0_57 = arith.constant 0 : index
      %c0_58 = arith.constant 0 : index
      %62 = vector.load %arg10[%c0_57, %c0_58] : memref<4x132xbf16, #tpu.memory_space<vmem>>, vector<4x4xbf16>
      tpu.vector_store %arg10[%c0_57, %c0_58], %61 {strides = array<i32>} : memref<4x132xbf16, #tpu.memory_space<vmem>>, vector<4x4xbf16>,
      %cst_59 = arith.constant 0.000000e+00 : bf16
      %63 = vector.broadcast %cst_59 : bf16 to vector<8x4xbf16>
      %c0_60 = arith.constant 0 : index
      %c0_61 = arith.constant 0 : index
      %64 = vector.load %arg11[%c0_60, %c0_61] : memref<8x132xbf16, #tpu.memory_space<vmem>>, vector<8x4xbf16>
      tpu.vector_store %arg11[%c0_60, %c0_61], %63 {strides = array<i32>} : memref<8x132xbf16, #tpu.memory_space<vmem>>, vector<8x4xbf16>,
    } else {
    }
    %c0_i32_1 = arith.constant 0 : i32
    %3 = arith.cmpi sgt, %arg1, %c0_i32_1 : i32
    %4 = arith.extui %3 : i1 to i32
    %c0_i32_2 = arith.constant 0 : i32
    %5 = arith.cmpi ne, %4, %c0_i32_2 : i32
    scf.if %5 {
      %c0_56 = arith.constant 0 : index
      %c128 = arith.constant 128 : index
      %61 = vector.load %arg10[%c0_56, %c128] : memref<4x132xbf16, #tpu.memory_space<vmem>>, vector<4x4xbf16>
      %c0_57 = arith.constant 0 : index
      %c0_58 = arith.constant 0 : index
      %62 = vector.load %arg10[%c0_57, %c0_58] : memref<4x132xbf16, #tpu.memory_space<vmem>>, vector<4x4xbf16>
      tpu.vector_store %arg10[%c0_57, %c0_58], %61 {strides = array<i32>} : memref<4x132xbf16, #tpu.memory_space<vmem>>, vector<4x4xbf16>,
      %c0_59 = arith.constant 0 : index
      %c128_60 = arith.constant 128 : index
      %63 = vector.load %arg11[%c0_59, %c128_60] : memref<8x132xbf16, #tpu.memory_space<vmem>>, vector<8x4xbf16>
      %c0_61 = arith.constant 0 : index
      %c0_62 = arith.constant 0 : index
      %64 = vector.load %arg11[%c0_61, %c0_62] : memref<8x132xbf16, #tpu.memory_space<vmem>>, vector<8x4xbf16>
      tpu.vector_store %arg11[%c0_61, %c0_62], %63 {strides = array<i32>} : memref<8x132xbf16, #tpu.memory_space<vmem>>, vector<8x4xbf16>,
    } else {
    }
    %c0 = arith.constant 0 : index
    %c0_3 = arith.constant 0 : index
    %c0_4 = arith.constant 0 : index
    %6 = vector.load %arg2[%c0, %c0_3, %c0_4] : memref<1x4x128xbf16, #tpu.memory_space<vmem>>, vector<1x4x128xbf16>
    %7 = vector.shape_cast %6 : vector<1x4x128xbf16> to vector<4x128xbf16>
    %c0_5 = arith.constant 0 : index
    %c4 = arith.constant 4 : index
    %8 = vector.load %arg10[%c0_5, %c4] : memref<4x132xbf16, #tpu.memory_space<vmem>>, vector<4x128xbf16>
    tpu.vector_store %arg10[%c0_5, %c4], %7 {strides = array<i32>} : memref<4x132xbf16, #tpu.memory_space<vmem>>, vector<4x128xbf16>,
    %c0_6 = arith.constant 0 : index
    %c0_7 = arith.constant 0 : index
    %c0_8 = arith.constant 0 : index
    %9 = vector.load %arg3[%c0_6, %c0_7, %c0_8] : memref<3x8x4xbf16, #tpu.memory_space<vmem>>, vector<1x8x4xbf16>
    %10 = vector.shape_cast %9 : vector<1x8x4xbf16> to vector<8x4xbf16>
    %c0_9 = arith.constant 0 : index
    %c0_10 = arith.constant 0 : index
    %11 = vector.load %arg10[%c0_9, %c0_10] : memref<4x132xbf16, #tpu.memory_space<vmem>>, vector<4x128xbf16>
    %cst = arith.constant dense<0.000000e+00> : vector<8x128xf32>
    %12 = tpu.matmul %10, %11, %cst {dimension_numbers = #tpu.dot_dimension_numbers<[1], [0], [0], [1], [0, 0, 1, 1], [], []>} : vector<8x4xbf16>, vector<4x128xbf16>, vector<8x128xf32> -> vector<8x128xf32>
    %c1 = arith.constant 1 : index
    %c0_11 = arith.constant 0 : index
    %c0_12 = arith.constant 0 : index
    %13 = vector.load %arg3[%c1, %c0_11, %c0_12] : memref<3x8x4xbf16, #tpu.memory_space<vmem>>, vector<1x8x4xbf16>
    %14 = vector.shape_cast %13 : vector<1x8x4xbf16> to vector<8x4xbf16>
    %c0_13 = arith.constant 0 : index
    %c2 = arith.constant 2 : index
    %15 = vector.load %arg10[%c0_13, %c2] : memref<4x132xbf16, #tpu.memory_space<vmem>>, vector<4x128xbf16>
    %cst_14 = arith.constant dense<0.000000e+00> : vector<8x128xf32>
    %16 = tpu.matmul %14, %15, %cst_14 {dimension_numbers = #tpu.dot_dimension_numbers<[1], [0], [0], [1], [0, 0, 1, 1], [], []>} : vector<8x4xbf16>, vector<4x128xbf16>, vector<8x128xf32> -> vector<8x128xf32>
    %17 = arith.addf %12, %16 : vector<8x128xf32>
    %c2_15 = arith.constant 2 : index
    %c0_16 = arith.constant 0 : index
    %c0_17 = arith.constant 0 : index
    %18 = vector.load %arg3[%c2_15, %c0_16, %c0_17] : memref<3x8x4xbf16, #tpu.memory_space<vmem>>, vector<1x8x4xbf16>
    %19 = vector.shape_cast %18 : vector<1x8x4xbf16> to vector<8x4xbf16>
    %c0_18 = arith.constant 0 : index
    %c4_19 = arith.constant 4 : index
    %20 = vector.load %arg10[%c0_18, %c4_19] : memref<4x132xbf16, #tpu.memory_space<vmem>>, vector<4x128xbf16>
    %cst_20 = arith.constant dense<0.000000e+00> : vector<8x128xf32>
    %21 = tpu.matmul %19, %20, %cst_20 {dimension_numbers = #tpu.dot_dimension_numbers<[1], [0], [0], [1], [0, 0, 1, 1], [], []>} : vector<8x4xbf16>, vector<4x128xbf16>, vector<8x128xf32> -> vector<8x128xf32>
    %22 = arith.addf %17, %21 : vector<8x128xf32>
    %c0_21 = arith.constant 0 : index
    %c0_22 = arith.constant 0 : index
    %23 = vector.load %arg4[%c0_21, %c0_22] : memref<8x1xf32, #tpu.memory_space<vmem>>, vector<8x1xf32>
    %24 = vector.broadcast %23 : vector<8x1xf32> to vector<8x128xf32>
    %25 = arith.addf %22, %24 : vector<8x128xf32>
    %cst_23 = arith.constant 0.000000e+00 : f32
    %26 = vector.broadcast %cst_23 : f32 to vector<8x128xf32>
    %27 = arith.maximumf %25, %26 : vector<8x128xf32>
    %28 = arith.truncf %27 : vector<8x128xf32> to vector<8x128xbf16>
    %c0_24 = arith.constant 0 : index
    %c4_25 = arith.constant 4 : index
    %29 = vector.load %arg11[%c0_24, %c4_25] : memref<8x132xbf16, #tpu.memory_space<vmem>>, vector<8x128xbf16>
    tpu.vector_store %arg11[%c0_24, %c4_25], %28 {strides = array<i32>} : memref<8x132xbf16, #tpu.memory_space<vmem>>, vector<8x128xbf16>,
    %c0_26 = arith.constant 0 : index
    %c0_27 = arith.constant 0 : index
    %c0_28 = arith.constant 0 : index
    %30 = vector.load %arg5[%c0_26, %c0_27, %c0_28] : memref<3x8x8xbf16, #tpu.memory_space<vmem>>, vector<1x8x8xbf16>
    %31 = vector.shape_cast %30 : vector<1x8x8xbf16> to vector<8x8xbf16>
    %c0_29 = arith.constant 0 : index
    %c0_30 = arith.constant 0 : index
    %32 = vector.load %arg11[%c0_29, %c0_30] : memref<8x132xbf16, #tpu.memory_space<vmem>>, vector<8x128xbf16>
    %cst_31 = arith.constant dense<0.000000e+00> : vector<8x128xf32>
    %33 = tpu.matmul %31, %32, %cst_31 {dimension_numbers = #tpu.dot_dimension_numbers<[1], [0], [0], [1], [0, 0, 1, 1], [], []>} : vector<8x8xbf16>, vector<8x128xbf16>, vector<8x128xf32> -> vector<8x128xf32>
    %c1_32 = arith.constant 1 : index
    %c0_33 = arith.constant 0 : index
    %c0_34 = arith.constant 0 : index
    %34 = vector.load %arg5[%c1_32, %c0_33, %c0_34] : memref<3x8x8xbf16, #tpu.memory_space<vmem>>, vector<1x8x8xbf16>
    %35 = vector.shape_cast %34 : vector<1x8x8xbf16> to vector<8x8xbf16>
    %c0_35 = arith.constant 0 : index
    %c2_36 = arith.constant 2 : index
    %36 = vector.load %arg11[%c0_35, %c2_36] : memref<8x132xbf16, #tpu.memory_space<vmem>>, vector<8x128xbf16>
    %cst_37 = arith.constant dense<0.000000e+00> : vector<8x128xf32>
    %37 = tpu.matmul %35, %36, %cst_37 {dimension_numbers = #tpu.dot_dimension_numbers<[1], [0], [0], [1], [0, 0, 1, 1], [], []>} : vector<8x8xbf16>, vector<8x128xbf16>, vector<8x128xf32> -> vector<8x128xf32>
    %38 = arith.addf %33, %37 : vector<8x128xf32>
    %c2_38 = arith.constant 2 : index
    %c0_39 = arith.constant 0 : index
    %c0_40 = arith.constant 0 : index
    %39 = vector.load %arg5[%c2_38, %c0_39, %c0_40] : memref<3x8x8xbf16, #tpu.memory_space<vmem>>, vector<1x8x8xbf16>
    %40 = vector.shape_cast %39 : vector<1x8x8xbf16> to vector<8x8xbf16>
    %c0_41 = arith.constant 0 : index
    %c4_42 = arith.constant 4 : index
    %41 = vector.load %arg11[%c0_41, %c4_42] : memref<8x132xbf16, #tpu.memory_space<vmem>>, vector<8x128xbf16>
    %cst_43 = arith.constant dense<0.000000e+00> : vector<8x128xf32>
    %42 = tpu.matmul %40, %41, %cst_43 {dimension_numbers = #tpu.dot_dimension_numbers<[1], [0], [0], [1], [0, 0, 1, 1], [], []>} : vector<8x8xbf16>, vector<8x128xbf16>, vector<8x128xf32> -> vector<8x128xf32>
    %43 = arith.addf %38, %42 : vector<8x128xf32>
    %c0_44 = arith.constant 0 : index
    %c0_45 = arith.constant 0 : index
    %44 = vector.load %arg6[%c0_44, %c0_45] : memref<8x1xf32, #tpu.memory_space<vmem>>, vector<8x1xf32>
    %45 = vector.broadcast %44 : vector<8x1xf32> to vector<8x128xf32>
    %46 = arith.addf %43, %45 : vector<8x128xf32>
    %cst_46 = arith.constant 0.000000e+00 : f32
    %47 = vector.broadcast %cst_46 : f32 to vector<8x128xf32>
    %48 = arith.maximumf %46, %47 : vector<8x128xf32>
    %c0_47 = arith.constant 0 : index
    %c0_48 = arith.constant 0 : index
    %49 = vector.load %arg7[%c0_47, %c0_48] : memref<8x4xbf16, #tpu.memory_space<vmem>>, vector<8x4xbf16>
    %cst_49 = arith.constant dense<0.000000e+00> : vector<8x128xf32>
    %50 = tpu.matmul %49, %7, %cst_49 {dimension_numbers = #tpu.dot_dimension_numbers<[1], [0], [0], [1], [0, 0, 1, 1], [], []>} : vector<8x4xbf16>, vector<4x128xbf16>, vector<8x128xf32> -> vector<8x128xf32>
    %c0_50 = arith.constant 0 : index
    %c0_51 = arith.constant 0 : index
    %51 = vector.load %arg8[%c0_50, %c0_51] : memref<8x1xf32, #tpu.memory_space<vmem>>, vector<8x1xf32>
    %52 = vector.broadcast %51 : vector<8x1xf32> to vector<8x128xf32>
    %53 = arith.addf %50, %52 : vector<8x128xf32>
    %54 = arith.addf %48, %53 : vector<8x128xf32>
    %cst_52 = arith.constant 0.000000e+00 : f32
    %55 = vector.broadcast %cst_52 : f32 to vector<8x128xf32>
    %56 = arith.maximumf %54, %55 : vector<8x128xf32>
    %57 = arith.truncf %56 : vector<8x128xf32> to vector<8x128xbf16>
    %c0_53 = arith.constant 0 : index
    %c0_54 = arith.constant 0 : index
    %c0_55 = arith.constant 0 : index
    %58 = vector.load %arg9[%c0_53, %c0_54, %c0_55] : memref<1x8x128xbf16, #tpu.memory_space<vmem>>, vector<1x8x128xbf16>
    %59 = vector.shape_cast %58 : vector<1x8x128xbf16> to vector<8x128xbf16>
    %60 = vector.shape_cast %57 : vector<8x128xbf16> to vector<1x8x128xbf16>
    tpu.vector_store %arg9[%c0_53, %c0_54, %c0_55], %60 {strides = array<i32>} : memref<1x8x128xbf16, #tpu.memory_space<vmem>>, vector<1x8x128xbf16>,
    return
  }
  func.func @transform_0(%arg0: i32, %arg1: i32) -> (i32, i32, i32) {
    %c0_i32 = arith.constant 0 : i32
    %c0_i32_0 = arith.constant 0 : i32
    return %arg0, %c0_i32, %arg1 : i32, i32, i32
  }
  func.func @transform_1(%arg0: i32, %arg1: i32) -> (i32, i32, i32) {
    %c0_i32 = arith.constant 0 : i32
    %c0_i32_0 = arith.constant 0 : i32
    %c0_i32_1 = arith.constant 0 : i32
    %c0_i32_2 = arith.constant 0 : i32
    return %c0_i32, %c0_i32_0, %c0_i32_1 : i32, i32, i32
  }
  func.func @transform_2(%arg0: i32, %arg1: i32) -> (i32, i32) {
    %c0_i32 = arith.constant 0 : i32
    %c0_i32_0 = arith.constant 0 : i32
    %c0_i32_1 = arith.constant 0 : i32
    return %c0_i32, %c0_i32_0 : i32, i32
  }
  func.func @transform_3(%arg0: i32, %arg1: i32) -> (i32, i32, i32) {
    %c0_i32 = arith.constant 0 : i32
    %c0_i32_0 = arith.constant 0 : i32
    %c0_i32_1 = arith.constant 0 : i32
    %c0_i32_2 = arith.constant 0 : i32
    return %c0_i32, %c0_i32_0, %c0_i32_1 : i32, i32, i32
  }
  func.func @transform_4(%arg0: i32, %arg1: i32) -> (i32, i32) {
    %c0_i32 = arith.constant 0 : i32
    %c0_i32_0 = arith.constant 0 : i32
    %c0_i32_1 = arith.constant 0 : i32
    return %c0_i32, %c0_i32_0 : i32, i32
  }
  func.func @transform_5(%arg0: i32, %arg1: i32) -> (i32, i32) {
    %c0_i32 = arith.constant 0 : i32
    %c0_i32_0 = arith.constant 0 : i32
    %c0_i32_1 = arith.constant 0 : i32
    return %c0_i32, %c0_i32_0 : i32, i32
  }
  func.func @transform_6(%arg0: i32, %arg1: i32) -> (i32, i32) {
    %c0_i32 = arith.constant 0 : i32
    %c0_i32_0 = arith.constant 0 : i32
    %c0_i32_1 = arith.constant 0 : i32
    return %c0_i32, %c0_i32_0 : i32, i32
  }
  func.func @transform_7(%arg0: i32, %arg1: i32) -> (i32, i32, i32) {
    %c0_i32 = arith.constant 0 : i32
    %c0_i32_0 = arith.constant 0 : i32
    return %arg0, %c0_i32, %arg1 : i32, i32, i32
  }
}

</mosaic_0001>

<llo_original>
// kernel: tpu_custom_call.1
$region0: #{tpu_custom_call.1}
  #allocation0 [shape = 'u32[]', space=smem, size = 0x4, offset = 0x4, fixed_abs, tag = 'smem constant byte address 0x4 - core index']
  #allocation1 [shape = 'u32[144,128]{1,0:T(1,128)}', space=vmem, size = 0x12000, scoped, tag = 'internal scratch']
  #allocation2 [shape = 'bf16[4,132]{1,0:T(4,128)(2,1)}', space=vmem, size = 0x800, scoped, tag = 'scratch operand']
  #allocation3 [shape = 'bf16[8,132]{1,0:T(8,128)(2,1)}', space=vmem, size = 0x1000, scoped, tag = 'scratch operand']
  %s0 = inlined_call_operand.vmem [shape: bf16[2,4,128], index: 0, kind: input, shape index: {}]
  %s1 = inlined_call_operand.vmem [shape: bf16[3,8,4], index: 1, kind: input, shape index: {}]
  %s2 = inlined_call_operand.vmem [shape: f32[8,1], index: 2, kind: input, shape index: {}]
  %s3 = inlined_call_operand.vmem [shape: bf16[3,8,8], index: 3, kind: input, shape index: {}]
  %s4 = inlined_call_operand.vmem [shape: f32[8,1], index: 4, kind: input, shape index: {}]
  %s5 = inlined_call_operand.vmem [shape: bf16[8,4], index: 5, kind: input, shape index: {}]
  %s6 = inlined_call_operand.vmem [shape: f32[8,1], index: 6, kind: input, shape index: {}]
  %s7 = inlined_call_operand.hbm [shape: bf16[2,8,128], index: 7, kind: output, shape index: {}]
  %s8 = sld [smem:[#allocation0]]
  $region69: #{tpu_custom_call.1} parent=0
    _
  %s10 = ssub.s32 1, %s8
  %s11 = scalar_select 0, %s10, %s8
  $region1: #{tpu_custom_call.1} parent=0
    #allocation4 [shape = 'u8[4096]{0}', space=vmem, size = 0x1000, scoped, tag = 'output window, operand 0']
    #allocation5 [shape = 's32[2]{0}', space=sflag, size = 0x8, scoped, tag = 'scoped memory for tpu_custom_call.1']
    %12 = vsyncpa [#allocation5], 0
    %s13 = scalar_lea.sflag [#allocation5], 1
    %14 = vsyncpa %s13, 0
    loop: start=0, step=1, limit=4
    $region2: #{tpu_custom_call.1} parent=1 // loop_pre_header
      _
    $region3: #{tpu_custom_call.1} parent=1 // loop_header
      %s16 = sphi 0, %s20
      %p17 = scmp.ge.s32.totalorder %s16, 4
      %s23 = sphi 0, %s35
      %s24 = sphi 0, %s31
      %s25 = sphi 0, %s23
      %s26 = sphi 0, %s24
      %s27 = sphi 0, %s25
      %s28 = sphi 0, %s26
      %s40 = sphi 0, %s42
      %s43 = sphi 0, %s40
      %s44 = sphi 0, %s43
      %s60 = sphi 0, %s44
      %s64 = sphi 0, %s64
      %s66 = sphi 0, %s64
      %s67 = sphi 0, %s66
      %s81 = sphi 0, %s67
      %s85 = sphi 0, %s85
      %s87 = sphi 0, %s85
      %s88 = sphi 0, %s87
      %s102 = sphi 0, %s88
      %s106 = sphi 0, %s106
      %s108 = sphi 0, %s106
      %s109 = sphi 0, %s108
      %s123 = sphi 0, %s109
      %s127 = sphi 0, %s127
      %s129 = sphi 0, %s127
      %s130 = sphi 0, %s129
      %s144 = sphi 0, %s130
      %s148 = sphi 0, %s148
      %s150 = sphi 0, %s148
      %s151 = sphi 0, %s150
      %s165 = sphi 0, %s151
      %s169 = sphi 0, %s169
      %s171 = sphi 0, %s169
      %s172 = sphi 0, %s171
      %s186 = sphi 0, %s172
      %s194 = sphi 0, %s196
      %s197 = sphi 0, %s194
      %s198 = sphi 0, %s197
      %s214 = sphi 0, %s198
    $region4: #{tpu_custom_call.1} parent=1 // loop_header_branch
      %19 = sbr.rel (%p17) target = $region8
    $region5: #{tpu_custom_call.1} parent=1 // loop_body
      %s21 = ssub.s32 %s16, 1
      %s22 = ssub.s32 %s16, 2
      %s29 = sadd.s32 1, %s24
      %p30 = scmp.ge.s32.totalorder %s29, 1
      %s31 = scalar_select %p30, 0, %s29
      %s32 = sadd.s32 1, %s23
      %s33 = scalar_select %p30, %s32, %s23
      %p34 = scmp.ge.s32.totalorder %s33, 2
      %s35 = scalar_select %p34, 0, %s33
      %s36 = ssub.s32 %s23, %s35
      %s37 = ssub.s32 %s24, %s31
      %s38 = sor.u32 %s36, %s37
      %p39 = scmp.eq.s32.totalorder %s38, 0
      %s41 = sadd.s32 %s40, 1
      %s42 = scalar_select %p39, %s40, %s41
      %p45 = pneg %p39
      %p46 = scmp.eq.s32.totalorder %s16, 1
      %p47 = por %p45, %p46
      %p48 = scmp.ne.s32.totalorder %s40, %s43
      %p49 = scmp.eq.s32.totalorder %s16, 0
      %p50 = por %p48, %p49
      %p51 = scmp.ne.s32.totalorder %s40, %s43
      %p52 = scmp.eq.s32.totalorder %s21, 1
      %p53 = por %p51, %p52
      %p54 = scmp.ne.s32.totalorder %s43, %s44
      %p55 = scmp.eq.s32.totalorder %s21, 0
      %p56 = por %p54, %p55
      %p57 = scmp.ne.s32.totalorder %s43, %s44
      %p58 = scmp.eq.s32.totalorder %s22, 1
      %p59 = por %p57, %p58
      %p61 = scmp.ne.s32.totalorder %s44, %s60
      %p62 = scmp.eq.s32.totalorder %s22, 0
      %p63 = por %p61, %p62
      %s65 = sadd.s32 %s64, 1
      %p68 = scmp.eq.s32.totalorder %s16, 1
      %p69 = scmp.ne.s32.totalorder %s64, %s66
      %p70 = scmp.eq.s32.totalorder %s16, 0
      %p71 = por %p69, %p70
      %p72 = scmp.ne.s32.totalorder %s64, %s66
      %p73 = scmp.eq.s32.totalorder %s21, 1
      %p74 = por %p72, %p73
      %p75 = scmp.ne.s32.totalorder %s66, %s67
      %p76 = scmp.eq.s32.totalorder %s21, 0
      %p77 = por %p75, %p76
      %p78 = scmp.ne.s32.totalorder %s66, %s67
      %p79 = scmp.eq.s32.totalorder %s22, 1
      %p80 = por %p78, %p79
      %p82 = scmp.ne.s32.totalorder %s67, %s81
      %p83 = scmp.eq.s32.totalorder %s22, 0
      %p84 = por %p82, %p83
      %s86 = sadd.s32 %s85, 1
      %p89 = scmp.eq.s32.totalorder %s16, 1
      %p90 = scmp.ne.s32.totalorder %s85, %s87
      %p91 = scmp.eq.s32.totalorder %s16, 0
      %p92 = por %p90, %p91
      %p93 = scmp.ne.s32.totalorder %s85, %s87
      %p94 = scmp.eq.s32.totalorder %s21, 1
      %p95 = por %p93, %p94
      %p96 = scmp.ne.s32.totalorder %s87, %s88
      %p97 = scmp.eq.s32.totalorder %s21, 0
      %p98 = por %p96, %p97
      %p99 = scmp.ne.s32.totalorder %s87, %s88
      %p100 = scmp.eq.s32.totalorder %s22, 1
      %p101 = por %p99, %p100
      %p103 = scmp.ne.s32.totalorder %s88, %s102
      %p104 = scmp.eq.s32.totalorder %s22, 0
      %p105 = por %p103, %p104
      %s107 = sadd.s32 %s106, 1
      %p110 = scmp.eq.s32.totalorder %s16, 1
      %p111 = scmp.ne.s32.totalorder %s106, %s108
      %p112 = scmp.eq.s32.totalorder %s16, 0
      %p113 = por %p111, %p112
      %p114 = scmp.ne.s32.totalorder %s106, %s108
      %p115 = scmp.eq.s32.totalorder %s21, 1
      %p116 = por %p114, %p115
      %p117 = scmp.ne.s32.totalorder %s108, %s109
      %p118 = scmp.eq.s32.totalorder %s21, 0
      %p119 = por %p117, %p118
      %p120 = scmp.ne.s32.totalorder %s108, %s109
      %p121 = scmp.eq.s32.totalorder %s22, 1
      %p122 = por %p120, %p121
      %p124 = scmp.ne.s32.totalorder %s109, %s123
      %p125 = scmp.eq.s32.totalorder %s22, 0
      %p126 = por %p124, %p125
      %s128 = sadd.s32 %s127, 1
      %p131 = scmp.eq.s32.totalorder %s16, 1
      %p132 = scmp.ne.s32.totalorder %s127, %s129
      %p133 = scmp.eq.s32.totalorder %s16, 0
      %p134 = por %p132, %p133
      %p135 = scmp.ne.s32.totalorder %s127, %s129
      %p136 = scmp.eq.s32.totalorder %s21, 1
      %p137 = por %p135, %p136
      %p138 = scmp.ne.s32.totalorder %s129, %s130
      %p139 = scmp.eq.s32.totalorder %s21, 0
      %p140 = por %p138, %p139
      %p141 = scmp.ne.s32.totalorder %s129, %s130
      %p142 = scmp.eq.s32.totalorder %s22, 1
      %p143 = por %p141, %p142
      %p145 = scmp.ne.s32.totalorder %s130, %s144
      %p146 = scmp.eq.s32.totalorder %s22, 0
      %p147 = por %p145, %p146
      %s149 = sadd.s32 %s148, 1
      %p152 = scmp.eq.s32.totalorder %s16, 1
      %p153 = scmp.ne.s32.totalorder %s148, %s150
      %p154 = scmp.eq.s32.totalorder %s16, 0
      %p155 = por %p153, %p154
      %p156 = scmp.ne.s32.totalorder %s148, %s150
      %p157 = scmp.eq.s32.totalorder %s21, 1
      %p158 = por %p156, %p157
      %p159 = scmp.ne.s32.totalorder %s150, %s151
      %p160 = scmp.eq.s32.totalorder %s21, 0
      %p161 = por %p159, %p160
      %p162 = scmp.ne.s32.totalorder %s150, %s151
      %p163 = scmp.eq.s32.totalorder %s22, 1
      %p164 = por %p162, %p163
      %p166 = scmp.ne.s32.totalorder %s151, %s165
      %p167 = scmp.eq.s32.totalorder %s22, 0
      %p168 = por %p166, %p167
      %s170 = sadd.s32 %s169, 1
      %p173 = scmp.eq.s32.totalorder %s16, 1
      %p174 = scmp.ne.s32.totalorder %s169, %s171
      %p175 = scmp.eq.s32.totalorder %s16, 0
      %p176 = por %p174, %p175
      %p177 = scmp.ne.s32.totalorder %s169, %s171
      %p178 = scmp.eq.s32.totalorder %s21, 1
      %p179 = por %p177, %p178
      %p180 = scmp.ne.s32.totalorder %s171, %s172
      %p181 = scmp.eq.s32.totalorder %s21, 0
      %p182 = por %p180, %p181
      %p183 = scmp.ne.s32.totalorder %s171, %s172
      %p184 = scmp.eq.s32.totalorder %s22, 1
      %p185 = por %p183, %p184
      %p187 = scmp.ne.s32.totalorder %s172, %s186
      %p188 = scmp.eq.s32.totalorder %s22, 0
      %p189 = por %p187, %p188
      %s190 = ssub.s32 %s23, %s35
      %s191 = ssub.s32 %s24, %s31
      %s192 = sor.u32 %s190, %s191
      %p193 = scmp.eq.s32.totalorder %s192, 0
      %s195 = sadd.s32 %s194, 1
      %s196 = scalar_select %p193, %s194, %s195
      %p199 = pneg %p193
      %p200 = scmp.eq.s32.totalorder %s16, 1
      %p201 = por %p199, %p200
      %p202 = scmp.ne.s32.totalorder %s194, %s197
      %p203 = scmp.eq.s32.totalorder %s16, 0
      %p204 = por %p202, %p203
      %p205 = scmp.ne.s32.totalorder %s194, %s197
      %p206 = scmp.eq.s32.totalorder %s21, 1
      %p207 = por %p205, %p206
      %p208 = scmp.ne.s32.totalorder %s197, %s198
      %p209 = scmp.eq.s32.totalorder %s21, 0
      %p210 = por %p208, %p209
      %p211 = scmp.ne.s32.totalorder %s197, %s198
      %p212 = scmp.eq.s32.totalorder %s22, 1
      %p213 = por %p211, %p212
      %p215 = scmp.ne.s32.totalorder %s198, %s214
      %p216 = scmp.eq.s32.totalorder %s22, 0
      %p217 = por %p215, %p216
      %p218 = scmp.le.s32.totalorder 1, %s16
      %p219 = scmp.lt.s32.totalorder %s16, 3
      %p220 = pnand %p218, %p219
      %p221 = pneg %p220
      // Predicated region
      $region9: #{tpu_custom_call.1} parent=5 // pred_check
        _
      $region10: #{tpu_custom_call.1} parent=5 // pred_check_branch
        %223 = sbr.rel (%p220) target = $region12
      $region11: #{tpu_custom_call.1} parent=5 // pred_region
        %s224 = ssub.s32 %s16, 1
        // Predicated region
        $region13: #{tpu_custom_call.1} parent=11 // pred_check
          %p225 = pneg %p77
        $region14: #{tpu_custom_call.1} parent=11 // pred_check_branch
          %227 = sbr.rel (%p225) target = $region16
        $region15: #{tpu_custom_call.1} parent=11 // pred_region
          _
        $region16: #{tpu_custom_call.1} parent=11 // pred_fallthru
          _
        // Predicated region
        $region17: #{tpu_custom_call.1} parent=11 // pred_check
          %p228 = pneg %p98
        $region18: #{tpu_custom_call.1} parent=11 // pred_check_branch
          %230 = sbr.rel (%p228) target = $region20
        $region19: #{tpu_custom_call.1} parent=11 // pred_region
          _
        $region20: #{tpu_custom_call.1} parent=11 // pred_fallthru
          _
        // Predicated region
        $region21: #{tpu_custom_call.1} parent=11 // pred_check
          %p231 = pneg %p119
        $region22: #{tpu_custom_call.1} parent=11 // pred_check_branch
          %233 = sbr.rel (%p231) target = $region24
        $region23: #{tpu_custom_call.1} parent=11 // pred_region
          _
        $region24: #{tpu_custom_call.1} parent=11 // pred_fallthru
          _
        // Predicated region
        $region25: #{tpu_custom_call.1} parent=11 // pred_check
          %p234 = pneg %p140
        $region26: #{tpu_custom_call.1} parent=11 // pred_check_branch
          %236 = sbr.rel (%p234) target = $region28
        $region27: #{tpu_custom_call.1} parent=11 // pred_region
          _
        $region28: #{tpu_custom_call.1} parent=11 // pred_fallthru
          _
        // Predicated region
        $region29: #{tpu_custom_call.1} parent=11 // pred_check
          %p237 = pneg %p161
        $region30: #{tpu_custom_call.1} parent=11 // pred_check_branch
          %239 = sbr.rel (%p237) target = $region32
        $region31: #{tpu_custom_call.1} parent=11 // pred_region
          _
        $region32: #{tpu_custom_call.1} parent=11 // pred_fallthru
          _
        // Predicated region
        $region33: #{tpu_custom_call.1} parent=11 // pred_check
          %p240 = pneg %p182
        $region34: #{tpu_custom_call.1} parent=11 // pred_check_branch
          %242 = sbr.rel (%p240) target = $region36
        $region35: #{tpu_custom_call.1} parent=11 // pred_region
          _
        $region36: #{tpu_custom_call.1} parent=11 // pred_fallthru
          _
      $region12: #{tpu_custom_call.1} parent=5 // pred_fallthru
        _
      %p243 = scmp.lt.s32.totalorder %s16, 2
      // Predicated region
      $region37: #{tpu_custom_call.1} parent=5 // pred_check
        %p244 = pneg %p243
      $region38: #{tpu_custom_call.1} parent=5 // pred_check_branch
        %246 = sbr.rel (%p244) target = $region40
      $region39: #{tpu_custom_call.1} parent=5 // pred_region
        // Predicated region
        $region41: #{tpu_custom_call.1} parent=39 // pred_check
          %p247 = pneg %p50
        $region42: #{tpu_custom_call.1} parent=39 // pred_check_branch
          %249 = sbr.rel (%p247) target = $region44
        $region43: #{tpu_custom_call.1} parent=39 // pred_region
          %p250 = scmp.lt.s32.totalorder %s23, 1
          %s251 = scalar_select %p250, %s23, 1
          %p252 = scmp.lt.s32.totalorder %s24, 0
          %s253 = scalar_select %p252, %s24, 0
          %s254 = sadd.s32 %s253, %s251
          %s255 = smul.addr %s254, 2
          %s256 = scalar_lea.vmem %s0, %s255
        $region44: #{tpu_custom_call.1} parent=39 // pred_fallthru
          _
      $region40: #{tpu_custom_call.1} parent=5 // pred_fallthru
        _
      %p257 = scmp.le.s32.totalorder 1, %s16
      %p258 = scmp.lt.s32.totalorder %s16, 3
      %p259 = pnand %p257, %p258
      %p260 = pneg %p259
      // Predicated region
      $region45: #{tpu_custom_call.1} parent=5 // pred_check
        _
      $region46: #{tpu_custom_call.1} parent=5 // pred_check_branch
        %262 = sbr.rel (%p259) target = $region48
      $region47: #{tpu_custom_call.1} parent=5 // pred_region
        %s263 = ssub.s32 %s16, 1
        %p264 = scmp.lt.s32.totalorder %s25, 1
        %s265 = scalar_select %p264, %s25, 1
        %p266 = scmp.lt.s32.totalorder %s26, 0
        %s267 = scalar_select %p266, %s26, 0
        %s268 = sadd.s32 %s267, %s265
        %s269 = smul.addr %s268, 2
        %s270 = scalar_lea.vmem %s0, %s269
        %p271 = pneg %p56
        %p272 = pneg %p53
        %p273 = pneg %p77
        %p274 = pneg %p74
        %p275 = pneg %p98
        %p276 = pneg %p95
        %p277 = pneg %p119
        %p278 = pneg %p116
        %p279 = pneg %p140
        %p280 = pneg %p137
        %p281 = pneg %p161
        %p282 = pneg %p158
        %p283 = pneg %p182
        %p284 = pneg %p179
        %p285 = pneg %p210
        %p286 = pneg %p207
        %s287 = sand.u32 %s197, 1
        %s288 = scalar_lea.sflag [#allocation5], %s287
        %s289 = sand.u32 %s197, 1
        %s290 = smul.addr %s289, 4
        %s291 = scalar_lea.vmem [#allocation4], %s290
        %p292 = scmp.lt.s32.totalorder %s25, 1
        %s293 = scalar_select %p292, %s25, 1
        %p294 = scmp.lt.s32.totalorder %s26, 0
        %s295 = scalar_select %p294, %s26, 0
        %s296 = sadd.s32 %s295, %s293
        %s297 = smul.addr %s296, 2
        %s298 = scalar_lea.vmem %s0, %s297
        %p300 = scmp.eq.s32.totalorder %s26, 0
        // Predicated region
        $region49: #{tpu_custom_call.1} parent=47 // pred_check
          %p301 = pneg %p300
        $region50: #{tpu_custom_call.1} parent=47 // pred_check_branch
          %303 = sbr.rel (%p301) target = $region52
        $region51: #{tpu_custom_call.1} parent=47 // pred_region
          %vm304 = vcmask 25600
          %305 = vst.msk [vmem:[#allocation2] sm:$0x3] %vm304, 0
          %vm306 = vcmask 27648
          %307 = vst.msk [vmem:[#allocation3] sm:$0xf] %vm306, 0
        $region52: #{tpu_custom_call.1} parent=47 // pred_fallthru
          _
        %p308 = scmp.gt.s32.totalorder %s26, 0
        // Predicated region
        $region53: #{tpu_custom_call.1} parent=47 // pred_check
          %p309 = pneg %p308
        $region54: #{tpu_custom_call.1} parent=47 // pred_check_branch
          %311 = sbr.rel (%p309) target = $region56
        $region55: #{tpu_custom_call.1} parent=47 // pred_region
          %v312 = vld [vmem:[#allocation2 + $0x2] sm:$0x3]
          %vm313 = vcmask 25600
          %314 = vst.msk [vmem:[#allocation2] sm:$0x3] %vm313, %v312
          %v315 = vld [vmem:[#allocation3 + $0x4] sm:$0xf]
          %vm316 = vcmask 27648
          %317 = vst.msk [vmem:[#allocation3] sm:$0xf] %vm316, %v315
        $region56: #{tpu_custom_call.1} parent=47 // pred_fallthru
          _
        %v318 = vld [vmem:[%s298] sm:$0x3]
        %320 = vrot.lane.b32.xlu0 %v318, 4
        %v321 = vpop.permute.xlu0 %320
        %v322 = vrot.slane %v321, 6
        %vm323 = vcmask 31744
        %v324 = vsel %vm323, %v322, %v321
        %vm326 = vcmask 1041440
        %vm327 = vcmask 27650
        %vm328 = vmor %vm327, %vm326
        %329 = vst.msk [vmem:[#allocation2] sm:$0xf] %vm328, %v324
        %v330 = vld [vmem:[%s1] sm:$0xf]
        %v331 = vld [vmem:[#allocation2] sm:$0x3]
        %s332 = scalar_lea.vmem %s1, 4
        %v333 = vld [vmem:[%s332] sm:$0xf]
        %v334 = vld [vmem:[#allocation2] sm:$0xf]
        %v337 = vunpack.c.l.s4 1983009808
        %v338 = vunpack.c.0.s8 %v337
        %v339 = vlaneseq
        %v340 = vshrl.u32 %v339, 7
        %v341 = vsub.s32 %v338, %v340
        %v342 = vrot.slane %v334, %v341
        %v343 = vcombine.high %v342, %v342
        %344 = vrot.lane.b32.xlu0 %v342, 126
        %v345 = vpop.permute.xlu0 %344
        %346 = vrot.lane.b32.xlu0 %v343, 126
        %v347 = vpop.permute.xlu0 %346
        %vm348 = vcmask 1031168
        %v349 = vsel %vm348, %v345, %v347
        %vm350 = vcmask 31744
        %v352 = vsel %vm350, %v333, 0
        %vm354 = vcmask 1041408
        %v356 = vsel %vm354, %v349, 0
        %358 = vmatprep.subr.bf16.mxu0 0
        %359 = vmatpush1.bf16.msra.mxu0 %v356
        %360 = vmatprep.subr.bf16.mxu0 0
        %361 = vmatpush1.bf16.msra.mxu0 0
        %362 = vmatprep.subr.bf16.mxu0 0
        %363 = vmatpush1.bf16.msra.mxu0 0
        %364 = vmatprep.subr.bf16.mxu0 0
        %365 = vmatpush1.bf16.msra.mxu0 0
        %366 = vmatprep.subr.bf16.mxu0 0
        %367 = vmatpush1.bf16.msra.mxu0 0
        %368 = vmatprep.subr.bf16.mxu0 0
        %369 = vmatpush1.bf16.msra.mxu0 0
        %370 = vmatprep.subr.bf16.mxu0 0
        %371 = vmatpush1.bf16.msra.mxu0 0
        %372 = vmatprep.subr.bf16.mxu0 0
        %373 = vmatpush1.bf16.msra.mxu0 0
        %374 = vmatprep.subr.bf16.mxu0 0
        %375 = vmatpush1.bf16.msra.mxu0 0
        %376 = vmatprep.subr.bf16.mxu0 0
        %377 = vmatpush1.bf16.msra.mxu0 0
        %378 = vmatprep.subr.bf16.mxu0 0
        %379 = vmatpush1.bf16.msra.mxu0 0
        %380 = vmatprep.subr.bf16.mxu0 0
        %381 = vmatpush1.bf16.msra.mxu0 0
        %382 = vmatprep.subr.bf16.mxu0 0
        %383 = vmatpush1.bf16.msra.mxu0 0
        %384 = vmatprep.subr.bf16.mxu0 0
        %385 = vmatpush1.bf16.msra.mxu0 0
        %386 = vmatprep.subr.bf16.mxu0 0
        %387 = vmatpush1.bf16.msra.mxu0 0
        %388 = vmatprep.subr.bf16.mxu0 0
        %389 = vmatpush1.bf16.msra.mxu0 0
        %390 = vmatprep.mubr.bf16.mxu0 0
        %391 = vmatmul.mubr.bf16.gmra.mrb[0].mxu0 %v352
        %v392 = vpop.f32.mrb[0].mxu0
        %v393 = vadd.f32 0.0, %v392
        %v394 = vpop.f32.mrb[0].mxu0
        %v395 = vpop.f32.mrb[0].mxu0
        %v396 = vpop.f32.mrb[0].mxu0
        %397 = vdwg.mxu0
        %v399 = vsel %vm350, %v330, 0
        %v402 = vsel %vm354, %v331, 0
        %404 = vmatprep.subr.bf16.mxu0 0
        %405 = vmatpush1.bf16.msra.mxu0 %v402
        %406 = vmatprep.subr.bf16.mxu0 0
        %407 = vmatpush1.bf16.msra.mxu0 0
        %408 = vmatprep.subr.bf16.mxu0 0
        %409 = vmatpush1.bf16.msra.mxu0 0
        %410 = vmatprep.subr.bf16.mxu0 0
        %411 = vmatpush1.bf16.msra.mxu0 0
        %412 = vmatprep.subr.bf16.mxu0 0
        %413 = vmatpush1.bf16.msra.mxu0 0
        %414 = vmatprep.subr.bf16.mxu0 0
        %415 = vmatpush1.bf16.msra.mxu0 0
        %416 = vmatprep.subr.bf16.mxu0 0
        %417 = vmatpush1.bf16.msra.mxu0 0
        %418 = vmatprep.subr.bf16.mxu0 0
        %419 = vmatpush1.bf16.msra.mxu0 0
        %420 = vmatprep.subr.bf16.mxu0 0
        %421 = vmatpush1.bf16.msra.mxu0 0
        %422 = vmatprep.subr.bf16.mxu0 0
        %423 = vmatpush1.bf16.msra.mxu0 0
        %424 = vmatprep.subr.bf16.mxu0 0
        %425 = vmatpush1.bf16.msra.mxu0 0
        %426 = vmatprep.subr.bf16.mxu0 0
        %427 = vmatpush1.bf16.msra.mxu0 0
        %428 = vmatprep.subr.bf16.mxu0 0
        %429 = vmatpush1.bf16.msra.mxu0 0
        %430 = vmatprep.subr.bf16.mxu0 0
        %431 = vmatpush1.bf16.msra.mxu0 0
        %432 = vmatprep.subr.bf16.mxu0 0
        %433 = vmatpush1.bf16.msra.mxu0 0
        %434 = vmatprep.subr.bf16.mxu0 0
        %435 = vmatpush1.bf16.msra.mxu0 0
        %436 = vmatprep.mubr.bf16.mxu0 0
        %437 = vmatmul.mubr.bf16.gmra.mrb[0].mxu0 %v399
        %v438 = vpop.f32.mrb[0].mxu0
        %v439 = vadd.f32 %v393, %v438
        %v440 = vpop.f32.mrb[0].mxu0
        %v441 = vpop.f32.mrb[0].mxu0
        %v442 = vpop.f32.mrb[0].mxu0
        %443 = vdwg.mxu0
        %s444 = scalar_lea.vmem %s1, 8
        %v445 = vld [vmem:[%s444] sm:$0xf]
        %v446 = vld [vmem:[#allocation2] sm:$0xf]
        %v449 = vunpack.c.l.s4 1983009808
        %v450 = vunpack.c.0.s8 %v449
        %v451 = vlaneseq
        %v452 = vshrl.u32 %v451, 7
        %v453 = vsub.s32 %v450, %v452
        %v454 = vrot.slane %v446, %v453
        %v455 = vcombine.high %v454, %v454
        %456 = vrot.lane.b32.xlu0 %v454, 124
        %v457 = vpop.permute.xlu0 %456
        %458 = vrot.lane.b32.xlu0 %v455, 124
        %v459 = vpop.permute.xlu0 %458
        %vm460 = vcmask 1014784
        %v461 = vsel %vm460, %v457, %v459
        %v463 = vsel %vm350, %v445, 0
        %v466 = vsel %vm354, %v461, 0
        %468 = vmatprep.subr.bf16.mxu0 0
        %469 = vmatpush1.bf16.msra.mxu0 %v466
        %470 = vmatprep.subr.bf16.mxu0 0
        %471 = vmatpush1.bf16.msra.mxu0 0
        %472 = vmatprep.subr.bf16.mxu0 0
        %473 = vmatpush1.bf16.msra.mxu0 0
        %474 = vmatprep.subr.bf16.mxu0 0
        %475 = vmatpush1.bf16.msra.mxu0 0
        %476 = vmatprep.subr.bf16.mxu0 0
        %477 = vmatpush1.bf16.msra.mxu0 0
        %478 = vmatprep.subr.bf16.mxu0 0
        %479 = vmatpush1.bf16.msra.mxu0 0
        %480 = vmatprep.subr.bf16.mxu0 0
        %481 = vmatpush1.bf16.msra.mxu0 0
        %482 = vmatprep.subr.bf16.mxu0 0
        %483 = vmatpush1.bf16.msra.mxu0 0
        %484 = vmatprep.subr.bf16.mxu0 0
        %485 = vmatpush1.bf16.msra.mxu0 0
        %486 = vmatprep.subr.bf16.mxu0 0
        %487 = vmatpush1.bf16.msra.mxu0 0
        %488 = vmatprep.subr.bf16.mxu0 0
        %489 = vmatpush1.bf16.msra.mxu0 0
        %490 = vmatprep.subr.bf16.mxu0 0
        %491 = vmatpush1.bf16.msra.mxu0 0
        %492 = vmatprep.subr.bf16.mxu0 0
        %493 = vmatpush1.bf16.msra.mxu0 0
        %494 = vmatprep.subr.bf16.mxu0 0
        %495 = vmatpush1.bf16.msra.mxu0 0
        %496 = vmatprep.subr.bf16.mxu0 0
        %497 = vmatpush1.bf16.msra.mxu0 0
        %498 = vmatprep.subr.bf16.mxu0 0
        %499 = vmatpush1.bf16.msra.mxu0 0
        %500 = vmatprep.mubr.bf16.mxu0 0
        %501 = vmatmul.mubr.bf16.gmra.mrb[0].mxu0 %v463
        %v502 = vpop.f32.mrb[0].mxu0
        %v503 = vadd.f32 0.0, %v502
        %v504 = vpop.f32.mrb[0].mxu0
        %v505 = vpop.f32.mrb[0].mxu0
        %v506 = vpop.f32.mrb[0].mxu0
        %507 = vdwg.mxu0
        %v508 = vadd.f32 %v439, %v503
        %v509 = vld [vmem:[%s2] sm:$0xff]
        %511 = vset.pattern.permute.xlu0 0
        %512 = vperm.xlu0 %511, %v509
        %v513 = vpop.permute.xlu0 %512
        %v515 = vadd.f32 %v508, %v513
        %v516 = vmax.f32 %v515, 0.0
        %v517 = vpack.c.bf16 %v516, %v516
        %v519 = vunpack.c.l.b16 %v517
        %v520 = vpack.c.b16 %v519, %v519
        %521 = vrot.lane.b32.xlu0 %v520, 4
        %v522 = vpop.permute.xlu0 %521
        %v523 = vrot.slane %v522, 4
        %v524 = vsel %vm323, %v523, %v522
        %vm526 = vcmask 1043488
        %vm527 = vcmask 31748
        %vm528 = vmor %vm527, %vm526
        %529 = vst.msk [vmem:[#allocation3] sm:$0xff] %vm528, %v524
        %v530 = vld [vmem:[%s3] sm:$0xf]
        %v531 = vld [vmem:[#allocation3] sm:$0xf]
        %s532 = scalar_lea.vmem %s3, 4
        %v533 = vld [vmem:[%s532] sm:$0xf]
        %v534 = vld [vmem:[#allocation3] sm:$0xff]
        %v536 = vunpack.c.l.b16 %v534
        %v537 = vunpack.c.h.b16 %v534
        %v538 = vpack.c.b16 %v536, %v536
        %v539 = vpack.c.b16 %v537, %v537
        %540 = vrot.lane.b32.xlu0 %v538, 126
        %v541 = vpop.permute.xlu0 %540
        %542 = vrot.lane.b32.xlu0 %v539, 126
        %v543 = vpop.permute.xlu0 %542
        %v544 = vsel %vm348, %v541, %v543
        %vm545 = vcmask 64512
        %v547 = vsel %vm545, %v533, 0
        %vm549 = vcmask 1043456
        %v551 = vsel %vm549, %v544, 0
        %553 = vmatprep.subr.bf16.mxu0 0
        %554 = vmatpush1.bf16.msra.mxu0 %v551
        %555 = vmatprep.subr.bf16.mxu0 0
        %556 = vmatpush1.bf16.msra.mxu0 0
        %557 = vmatprep.subr.bf16.mxu0 0
        %558 = vmatpush1.bf16.msra.mxu0 0
        %559 = vmatprep.subr.bf16.mxu0 0
        %560 = vmatpush1.bf16.msra.mxu0 0
        %561 = vmatprep.subr.bf16.mxu0 0
        %562 = vmatpush1.bf16.msra.mxu0 0
        %563 = vmatprep.subr.bf16.mxu0 0
        %564 = vmatpush1.bf16.msra.mxu0 0
        %565 = vmatprep.subr.bf16.mxu0 0
        %566 = vmatpush1.bf16.msra.mxu0 0
        %567 = vmatprep.subr.bf16.mxu0 0
        %568 = vmatpush1.bf16.msra.mxu0 0
        %569 = vmatprep.subr.bf16.mxu0 0
        %570 = vmatpush1.bf16.msra.mxu0 0
        %571 = vmatprep.subr.bf16.mxu0 0
        %572 = vmatpush1.bf16.msra.mxu0 0
        %573 = vmatprep.subr.bf16.mxu0 0
        %574 = vmatpush1.bf16.msra.mxu0 0
        %575 = vmatprep.subr.bf16.mxu0 0
        %576 = vmatpush1.bf16.msra.mxu0 0
        %577 = vmatprep.subr.bf16.mxu0 0
        %578 = vmatpush1.bf16.msra.mxu0 0
        %579 = vmatprep.subr.bf16.mxu0 0
        %580 = vmatpush1.bf16.msra.mxu0 0
        %581 = vmatprep.subr.bf16.mxu0 0
        %582 = vmatpush1.bf16.msra.mxu0 0
        %583 = vmatprep.subr.bf16.mxu0 0
        %584 = vmatpush1.bf16.msra.mxu0 0
        %585 = vmatprep.mubr.bf16.mxu0 0
        %586 = vmatmul.mubr.bf16.gmra.mrb[0].mxu0 %v547
        %v587 = vpop.f32.mrb[0].mxu0
        %v588 = vadd.f32 0.0, %v587
        %v589 = vpop.f32.mrb[0].mxu0
        %v590 = vpop.f32.mrb[0].mxu0
        %v591 = vpop.f32.mrb[0].mxu0
        %592 = vdwg.mxu0
        %v594 = vsel %vm545, %v530, 0
        %v597 = vsel %vm549, %v531, 0
        %599 = vmatprep.subr.bf16.mxu0 0
        %600 = vmatpush1.bf16.msra.mxu0 %v597
        %601 = vmatprep.subr.bf16.mxu0 0
        %602 = vmatpush1.bf16.msra.mxu0 0
        %603 = vmatprep.subr.bf16.mxu0 0
        %604 = vmatpush1.bf16.msra.mxu0 0
        %605 = vmatprep.subr.bf16.mxu0 0
        %606 = vmatpush1.bf16.msra.mxu0 0
        %607 = vmatprep.subr.bf16.mxu0 0
        %608 = vmatpush1.bf16.msra.mxu0 0
        %609 = vmatprep.subr.bf16.mxu0 0
        %610 = vmatpush1.bf16.msra.mxu0 0
        %611 = vmatprep.subr.bf16.mxu0 0
        %612 = vmatpush1.bf16.msra.mxu0 0
        %613 = vmatprep.subr.bf16.mxu0 0
        %614 = vmatpush1.bf16.msra.mxu0 0
        %615 = vmatprep.subr.bf16.mxu0 0
        %616 = vmatpush1.bf16.msra.mxu0 0
        %617 = vmatprep.subr.bf16.mxu0 0
        %618 = vmatpush1.bf16.msra.mxu0 0
        %619 = vmatprep.subr.bf16.mxu0 0
        %620 = vmatpush1.bf16.msra.mxu0 0
        %621 = vmatprep.subr.bf16.mxu0 0
        %622 = vmatpush1.bf16.msra.mxu0 0
        %623 = vmatprep.subr.bf16.mxu0 0
        %624 = vmatpush1.bf16.msra.mxu0 0
        %625 = vmatprep.subr.bf16.mxu0 0
        %626 = vmatpush1.bf16.msra.mxu0 0
        %627 = vmatprep.subr.bf16.mxu0 0
        %628 = vmatpush1.bf16.msra.mxu0 0
        %629 = vmatprep.subr.bf16.mxu0 0
        %630 = vmatpush1.bf16.msra.mxu0 0
        %631 = vmatprep.mubr.bf16.mxu0 0
        %632 = vmatmul.mubr.bf16.gmra.mrb[0].mxu0 %v594
        %v633 = vpop.f32.mrb[0].mxu0
        %v634 = vadd.f32 %v588, %v633
        %v635 = vpop.f32.mrb[0].mxu0
        %v636 = vpop.f32.mrb[0].mxu0
        %v637 = vpop.f32.mrb[0].mxu0
        %638 = vdwg.mxu0
        %s639 = scalar_lea.vmem %s3, 8
        %v640 = vld [vmem:[%s639] sm:$0xf]
        %641 = vrot.lane.b32.xlu0 %v538, 124
        %v642 = vpop.permute.xlu0 %641
        %643 = vrot.lane.b32.xlu0 %v539, 124
        %v644 = vpop.permute.xlu0 %643
        %v645 = vsel %vm460, %v642, %v644
        %v647 = vsel %vm545, %v640, 0
        %v650 = vsel %vm549, %v645, 0
        %652 = vmatprep.subr.bf16.mxu0 0
        %653 = vmatpush1.bf16.msra.mxu0 %v650
        %654 = vmatprep.subr.bf16.mxu0 0
        %655 = vmatpush1.bf16.msra.mxu0 0
        %656 = vmatprep.subr.bf16.mxu0 0
        %657 = vmatpush1.bf16.msra.mxu0 0
        %658 = vmatprep.subr.bf16.mxu0 0
        %659 = vmatpush1.bf16.msra.mxu0 0
        %660 = vmatprep.subr.bf16.mxu0 0
        %661 = vmatpush1.bf16.msra.mxu0 0
        %662 = vmatprep.subr.bf16.mxu0 0
        %663 = vmatpush1.bf16.msra.mxu0 0
        %664 = vmatprep.subr.bf16.mxu0 0
        %665 = vmatpush1.bf16.msra.mxu0 0
        %666 = vmatprep.subr.bf16.mxu0 0
        %667 = vmatpush1.bf16.msra.mxu0 0
        %668 = vmatprep.subr.bf16.mxu0 0
        %669 = vmatpush1.bf16.msra.mxu0 0
        %670 = vmatprep.subr.bf16.mxu0 0
        %671 = vmatpush1.bf16.msra.mxu0 0
        %672 = vmatprep.subr.bf16.mxu0 0
        %673 = vmatpush1.bf16.msra.mxu0 0
        %674 = vmatprep.subr.bf16.mxu0 0
        %675 = vmatpush1.bf16.msra.mxu0 0
        %676 = vmatprep.subr.bf16.mxu0 0
        %677 = vmatpush1.bf16.msra.mxu0 0
        %678 = vmatprep.subr.bf16.mxu0 0
        %679 = vmatpush1.bf16.msra.mxu0 0
        %680 = vmatprep.subr.bf16.mxu0 0
        %681 = vmatpush1.bf16.msra.mxu0 0
        %682 = vmatprep.subr.bf16.mxu0 0
        %683 = vmatpush1.bf16.msra.mxu0 0
        %684 = vmatprep.mubr.bf16.mxu0 0
        %685 = vmatmul.mubr.bf16.gmra.mrb[0].mxu0 %v647
        %v686 = vpop.f32.mrb[0].mxu0
        %v687 = vadd.f32 0.0, %v686
        %v688 = vpop.f32.mrb[0].mxu0
        %v689 = vpop.f32.mrb[0].mxu0
        %v690 = vpop.f32.mrb[0].mxu0
        %691 = vdwg.mxu0
        %v692 = vadd.f32 %v634, %v687
        %v693 = vld [vmem:[%s4] sm:$0xff]
        %695 = vset.pattern.permute.xlu0 0
        %696 = vperm.xlu0 %695, %v693
        %v697 = vpop.permute.xlu0 %696
        %v699 = vadd.f32 %v692, %v697
        %v700 = vmax.f32 %v699, 0.0
        %v701 = vld [vmem:[%s5] sm:$0xf]
        %v702 = vld [vmem:[%s6] sm:$0xff]
        %704 = vset.pattern.permute.xlu0 0
        %705 = vperm.xlu0 %704, %v702
        %v706 = vpop.permute.xlu0 %705
        %v709 = vsel %vm350, %v701, 0
        %v712 = vsel %vm354, %v318, 0
        %714 = vmatprep.subr.bf16.mxu0 0
        %715 = vmatpush1.bf16.msra.mxu0 %v712
        %716 = vmatprep.subr.bf16.mxu0 0
        %717 = vmatpush1.bf16.msra.mxu0 0
        %718 = vmatprep.subr.bf16.mxu0 0
        %719 = vmatpush1.bf16.msra.mxu0 0
        %720 = vmatprep.subr.bf16.mxu0 0
        %721 = vmatpush1.bf16.msra.mxu0 0
        %722 = vmatprep.subr.bf16.mxu0 0
        %723 = vmatpush1.bf16.msra.mxu0 0
        %724 = vmatprep.subr.bf16.mxu0 0
        %725 = vmatpush1.bf16.msra.mxu0 0
        %726 = vmatprep.subr.bf16.mxu0 0
        %727 = vmatpush1.bf16.msra.mxu0 0
        %728 = vmatprep.subr.bf16.mxu0 0
        %729 = vmatpush1.bf16.msra.mxu0 0
        %730 = vmatprep.subr.bf16.mxu0 0
        %731 = vmatpush1.bf16.msra.mxu0 0
        %732 = vmatprep.subr.bf16.mxu0 0
        %733 = vmatpush1.bf16.msra.mxu0 0
        %734 = vmatprep.subr.bf16.mxu0 0
        %735 = vmatpush1.bf16.msra.mxu0 0
        %736 = vmatprep.subr.bf16.mxu0 0
        %737 = vmatpush1.bf16.msra.mxu0 0
        %738 = vmatprep.subr.bf16.mxu0 0
        %739 = vmatpush1.bf16.msra.mxu0 0
        %740 = vmatprep.subr.bf16.mxu0 0
        %741 = vmatpush1.bf16.msra.mxu0 0
        %742 = vmatprep.subr.bf16.mxu0 0
        %743 = vmatpush1.bf16.msra.mxu0 0
        %744 = vmatprep.subr.bf16.mxu0 0
        %745 = vmatpush1.bf16.msra.mxu0 0
        %746 = vmatprep.mubr.bf16.mxu0 0
        %747 = vmatmul.mubr.bf16.gmra.mrb[0].mxu0 %v709
        %v748 = vpop.f32.mrb[0].mxu0
        %v749 = vadd.f32 %v706, %v748
        %v750 = vpop.f32.mrb[0].mxu0
        %v751 = vpop.f32.mrb[0].mxu0
        %v752 = vpop.f32.mrb[0].mxu0
        %753 = vdwg.mxu0
        %v754 = vadd.f32 %v700, %v749
        %v755 = vmax.f32 %v754, 0.0
        %v756 = vpack.c.bf16 %v755, %v755
        %757 = vst [vmem:[%s291] sm:$0xf] %v756
        %s758 = sand.u32 %s197, 1
        %s759 = scalar_lea.sflag [#allocation5], %s758
        %s760 = sand.u32 %s197, 1
        %s761 = smul.addr %s760, 4
        %s762 = scalar_lea.vmem [#allocation4], %s761
        // Predicated region
        $region57: #{tpu_custom_call.1} parent=47 // pred_check
          %p763 = pneg %p207
        $region58: #{tpu_custom_call.1} parent=47 // pred_check_branch
          %765 = sbr.rel (%p763) target = $region60
        $region59: #{tpu_custom_call.1} parent=47 // pred_region
          %s767 = ssub.s32 64, 64
          %768 = vsyncadd %s759, %s767
          %s769 = sadd.s32 %s26, %s25
          %s770 = smul.addr %s769, 64
          %s771 = scalar_lea.hbm %s7, %s770
          %s773 = sshll.u32 %s762, 4
          %s774 = int_to_ptr.vmem [resolvable:$true] %s773
          %776 = dma.vmem_to_hbm [thread:$0]  %s774, 64, %s771, %s759
        $region60: #{tpu_custom_call.1} parent=47 // pred_fallthru
          _
      $region48: #{tpu_custom_call.1} parent=5 // pred_fallthru
        _
      %p777 = scmp.le.s32.totalorder 2, %s16
      // Predicated region
      $region61: #{tpu_custom_call.1} parent=5 // pred_check
        %p778 = pneg %p777
      $region62: #{tpu_custom_call.1} parent=5 // pred_check_branch
        %780 = sbr.rel (%p778) target = $region64
      $region63: #{tpu_custom_call.1} parent=5 // pred_region
        %s781 = ssub.s32 %s16, 2
        // Predicated region
        $region65: #{tpu_custom_call.1} parent=63 // pred_check
          %p782 = pneg %p213
        $region66: #{tpu_custom_call.1} parent=63 // pred_check_branch
          %784 = sbr.rel (%p782) target = $region68
        $region67: #{tpu_custom_call.1} parent=63 // pred_region
          %s785 = sand.u32 %s198, 1
          %s786 = scalar_lea.sflag [#allocation5], %s785
          %s787 = sand.u32 %s198, 1
          %s788 = smul.addr %s787, 4
          %s789 = scalar_lea.vmem [#allocation4], %s788
          %790 = dma.done %s786, 64
        $region68: #{tpu_custom_call.1} parent=63 // pred_fallthru
          _
      $region64: #{tpu_custom_call.1} parent=5 // pred_fallthru
        _
    $region6: #{tpu_custom_call.1} parent=1 // loop_footer
      %s20 = sadd.s32 1, %s16
    $region7: #{tpu_custom_call.1} parent=1 // loop_footer_branch
      %15 = sbr.rel target = $region3
    $region8: #{tpu_custom_call.1} parent=1 // loop_exit
      _
    %791 = vsyncpa [#allocation5], 1
    %s792 = scalar_lea.sflag [#allocation5], 1
    %793 = vsyncpa %s792, 1

</llo_original>
